<compile_context>
chip_gen: v5e
topology: v5e:2x2
jax: 0.10.0
libtpu: 0.0.40
codegen_flags: <defaults>
</compile_context>

<pallas_src>
import functools

import jax
import jax.numpy as jnp
from jax import lax
from jax.experimental import pallas as pl
from jax.experimental.pallas import tpu as pltpu


def _round_up(x: int, m: int) -> int:
    return (x + m - 1) // m * m


def _first_argmax_onehot(y, lane):
    """f32 one-hot of the first (lowest-index) argmax of `y` along the last axis."""
    m = jnp.max(y, axis=-1, keepdims=True)
    idx = jnp.min(jnp.where(y == m, lane, y.shape[-1]), axis=-1, keepdims=True)
    return (lane == idx).astype(jnp.float32)


def _probs_kernel(la_ref, g_ref, probs_ref, selt_ref, *, tau, training):
    """One-shot gumbel-softmax + selection-matrix kernel (whole arrays in VMEM).

    Outputs:
      probs_ref : (d_out_pad, d_in_pad)  gumbel-softmax probabilities (soft or hard)
      selt_ref  : (d_in_pad, d_out_pad)  selection matrix, pre-transposed so the
                  batch matmul kernel computes x @ sel.T as (M,K)@(K,N).
    """
    la = la_ref[...].astype(jnp.float32)
    g = g_ref[...].astype(jnp.float32)

    # gumbel-softmax over the last (feature-input) dim; exact normalization so
    # returned probability rows sum to 1 (review correctness concern).
    y = (la + g) * (1.0 / tau)
    m = jnp.max(y, axis=-1, keepdims=True)
    e = jnp.exp(y - m)
    s = jnp.sum(e, axis=-1, keepdims=True)
    soft = e / s

    lane = lax.broadcasted_iota(jnp.int32, la.shape, 1)
    if training:
        probs = soft                              # hard=False
        sel = soft                                # features = x @ probs.T
    else:
        # hard=True forward value: one-hot of argmax of the gumbel-perturbed logits
        probs = _first_argmax_onehot(y, lane)
        # features = x[:, argmax(log_alphas, axis=1)] == x @ onehot(argmax(la)).T
        sel = _first_argmax_onehot(la, lane)

    probs_ref[...] = probs
    selt_ref[...] = sel.T                         # one-time transpose (not in hot loop)


def _select_matmul_kernel(x_ref, selt_ref, feat_ref):
    """Streaming batch-tiled matmul: feat = x_tile @ sel_t (MXU, f32 accumulate)."""
    feat_ref[...] = jnp.dot(
        x_ref[...], selt_ref[...], preferred_element_type=jnp.float32
    ).astype(feat_ref.dtype)


def concrete_feature_selection_forward(x, log_alphas, key,
                                       temperature=10.0, training=True):
    """Mirrors ConcreteFeatureSelection.forward (x: [B, D_in]) on TPU."""
    b, d_in = x.shape
    d_out, d_in2 = log_alphas.shape
    assert d_in2 == d_in

    # Lane-dense padding of both feature dims.
    d_in_pad = _round_up(d_in, 128)
    d_out_pad = _round_up(d_out, 128)

    # Gumbel(0,1) noise generated host-side / via plain XLA (portable; the
    # in-kernel hardware PRNG has no interpret/CPU lowering).
    gumbel = jax.random.gumbel(key, (d_out, d_in), dtype=jnp.float32)

    # Pad log_alphas with a large negative so padded columns never contribute to
    # the softmax nor win an argmax; gumbel pads with zeros.
    neg = jnp.float32(-1e9)
    la_pad = jnp.full((d_out_pad, d_in_pad), neg, dtype=jnp.float32)
    la_pad = la_pad.at[:d_out, :d_in].set(log_alphas.astype(jnp.float32))
    g_pad = jnp.zeros((d_out_pad, d_in_pad), dtype=jnp.float32)
    g_pad = g_pad.at[:d_out, :d_in].set(gumbel)

    # --- 1) tiny one-shot kernel: probabilities + pre-transposed selection ----
    probs_pad, selt_pad = pl.pallas_call(
        functools.partial(_probs_kernel, tau=float(temperature),
                          training=bool(training)),
        out_shape=(
            jax.ShapeDtypeStruct((d_out_pad, d_in_pad), jnp.float32),
            jax.ShapeDtypeStruct((d_in_pad, d_out_pad), jnp.float32),
        ),
    )(la_pad, g_pad)

    # --- 2) batch-tiled streaming matmul ---------------------------------------
    # Adaptive tile_b: target ~MiB-class double-buffered x + feature tiles so the
    # pipeline amortizes per-step overhead without risking VMEM on v7x (64 MiB).
    bytes_per_row = 4 * (d_in_pad + d_out_pad)
    budget = 8 * 1024 * 1024                      # x + feat tiles, double-buffered
    rows = budget // (2 * bytes_per_row)
    tile_b = max(8, min(_round_up(b, 8), (rows // 8) * 8, 2048))
    b_pad = _round_up(b, tile_b)

    x_pad = jnp.zeros((b_pad, d_in_pad), x.dtype).at[:b, :d_in].set(x)

    feats_pad = pl.pallas_call(
        _select_matmul_kernel,
        out_shape=jax.ShapeDtypeStruct((b_pad, d_out_pad), x.dtype),
        grid=(b_pad // tile_b,),
        in_specs=[
            pl.BlockSpec((tile_b, d_in_pad), lambda i: (i, 0)),      # x tile
            pl.BlockSpec((d_in_pad, d_out_pad), lambda i: (0, 0)),   # sel.T (resident)
        ],
        out_specs=pl.BlockSpec((tile_b, d_out_pad), lambda i: (i, 0)),
        compiler_params=pltpu.CompilerParams(
            # No cross-step dependence: batch axis is parallel (megacore on v7x).
            dimension_semantics=("parallel",),
            vmem_limit_bytes=32 * 1024 * 1024,
        ),
    )(x_pad, selt_pad)

    return feats_pad[:b, :d_out], probs_pad[:d_out, :d_in]


if __name__ == "__main__":
    batch, input_dim, output_dim = 8, 32, 16
    temperature = 10.0

    key = jax.random.PRNGKey(0)
    x = jax.random.normal(key, (batch, input_dim), dtype=jnp.float32)
    # Module __init__: log_alphas = ones(output_dim, input_dim)
    log_alphas = jnp.ones((output_dim, input_dim), dtype=jnp.float32)

    noise_key = jax.random.PRNGKey(42)

    # training-mode forward (soft probs, streaming MXU matmul)
    feats_train, probs_train = concrete_feature_selection_forward(
        x, log_alphas, noise_key, temperature=temperature, training=True)
    # eval-mode forward (hard one-hot probs, deterministic feature selection)
    feats_eval, probs_eval = concrete_feature_selection_forward(
        x, log_alphas, noise_key, temperature=temperature, training=False)

    jax.block_until_ready((feats_train, probs_train, feats_eval, probs_eval))

    assert feats_train.shape == (batch, output_dim)
    assert probs_train.shape == (output_dim, input_dim)
    assert feats_eval.shape == (batch, output_dim)
    assert probs_eval.shape == (output_dim, input_dim)

    # training: soft probability rows sum to 1; features == x @ probs.T
    assert jnp.allclose(probs_train.sum(axis=-1), 1.0, atol=1e-3)
    assert jnp.allclose(feats_train, x @ probs_train.T, atol=1e-3, rtol=1e-3)

    # eval: one-hot probability rows; features == x[:, argmax(log_alphas, 1)]
    assert jnp.allclose(probs_eval.sum(axis=-1), 1.0)
    assert jnp.allclose(probs_eval.max(axis=-1), 1.0)
    ref_eval = x[:, jnp.argmax(log_alphas, axis=1)]
    assert jnp.allclose(feats_eval, ref_eval, atol=1e-4)

    print("KERNEL_OK")
</pallas_src>

<mosaic_0001>
module attributes {stable_mosaic.version = 11 : i64} {
  func.func @_probs_kernel(%arg0: memref<128x128xf32, #tpu.memory_space<vmem>>, %arg1: memref<128x128xf32, #tpu.memory_space<vmem>>, %arg2: memref<128x128xf32, #tpu.memory_space<vmem>>, %arg3: memref<128x128xf32, #tpu.memory_space<vmem>>) attributes {dimension_semantics = [], scalar_prefetch = 0 : i64, scratch_operands = 0 : i64, tpu.core_type = #tpu.core_type<tc>} {
    %c0 = arith.constant 0 : index
    %c0_0 = arith.constant 0 : index
    %0 = vector.load %arg0[%c0, %c0_0] : memref<128x128xf32, #tpu.memory_space<vmem>>, vector<128x128xf32>
    %c0_1 = arith.constant 0 : index
    %c0_2 = arith.constant 0 : index
    %1 = vector.load %arg1[%c0_1, %c0_2] : memref<128x128xf32, #tpu.memory_space<vmem>>, vector<128x128xf32>
    %2 = arith.addf %0, %1 : vector<128x128xf32>
    %cst = arith.constant 1.000000e-01 : f32
    %3 = vector.broadcast %cst : f32 to vector<128x128xf32>
    %4 = arith.mulf %2, %3 : vector<128x128xf32>
    %cst_3 = arith.constant dense<0xFF800000> : vector<128xf32>
    %5 = vector.multi_reduction <maximumf>, %4, %cst_3 [1] : vector<128x128xf32> to vector<128xf32>
    %6 = vector.shape_cast %5 : vector<128xf32> to vector<128x1xf32>
    %7 = vector.broadcast %6 : vector<128x1xf32> to vector<128x128xf32>
    %8 = arith.subf %4, %7 : vector<128x128xf32>
    %9 = math.exp %8 : vector<128x128xf32>
    %cst_4 = arith.constant dense<0.000000e+00> : vector<128xf32>
    %10 = vector.multi_reduction <add>, %9, %cst_4 [1] : vector<128x128xf32> to vector<128xf32>
    %11 = vector.shape_cast %10 : vector<128xf32> to vector<128x1xf32>
    %12 = vector.broadcast %11 : vector<128x1xf32> to vector<128x128xf32>
    %13 = arith.divf %9, %12 : vector<128x128xf32>
    %c0_5 = arith.constant 0 : index
    %c0_6 = arith.constant 0 : index
    %14 = vector.load %arg2[%c0_5, %c0_6] : memref<128x128xf32, #tpu.memory_space<vmem>>, vector<128x128xf32>
    tpu.vector_store %arg2[%c0_5, %c0_6], %13 {strides = array<i32>} : memref<128x128xf32, #tpu.memory_space<vmem>>, vector<128x128xf32>,
    %15 = tpu.transpose %13, [1, 0] : vector<128x128xf32> -> vector<128x128xf32>
    %c0_7 = arith.constant 0 : index
    %c0_8 = arith.constant 0 : index
    %16 = vector.load %arg3[%c0_7, %c0_8] : memref<128x128xf32, #tpu.memory_space<vmem>>, vector<128x128xf32>
    tpu.vector_store %arg3[%c0_7, %c0_8], %15 {strides = array<i32>} : memref<128x128xf32, #tpu.memory_space<vmem>>, vector<128x128xf32>,
    return
  }
}

</mosaic_0001>

<llo_original>
// kernel: tpu_custom_call.1
$region0: #{tpu_custom_call.1}
  #allocation0 [shape = 'u32[]', space=smem, size = 0x4, offset = 0x4, fixed_abs, tag = 'smem constant byte address 0x4 - core index']
  #allocation1 [shape = 'u32[72,128]{1,0:T(1,128)}', space=vmem, size = 0x9000, scoped, tag = 'internal scratch']
  %s0 = inlined_call_operand.hbm [shape: f32[128,128], index: 0, kind: input, shape index: {}]
  %s1 = inlined_call_operand.hbm [shape: f32[128,128], index: 1, kind: input, shape index: {}]
  %s2 = inlined_call_operand.hbm [shape: f32[128,128], index: 2, kind: output, shape index: {0}]
  %s3 = inlined_call_operand.hbm [shape: f32[128,128], index: 3, kind: output, shape index: {1}]
  %4 = xla_tuple %s2, %s3
  %s5 = sld [smem:[#allocation0]]
  $region34: #{tpu_custom_call.1} parent=0
    _
  %s7 = ssub.s32 1, %s5
  %s8 = scalar_select 0, %s7, %s5
  $region1: #{tpu_custom_call.1} parent=0
    #allocation2 [shape = 'u8[65536]{0}', space=vmem, size = 0x10000, scoped, tag = 'input window, operand 0, single buffered']
    #allocation3 [shape = 's32[1]{0}', space=sflag, size = 0x4, scoped, tag = 'scoped memory for tpu_custom_call.1']
    #allocation4 [shape = 's32[1]{0}', space=sflag, size = 0x4, scoped, tag = 'scoped memory for tpu_custom_call.1']
    #allocation5 [shape = 'u8[65536]{0}', space=vmem, size = 0x10000, scoped, tag = 'input window, operand 1, single buffered']
    #allocation6 [shape = 's32[1]{0}', space=sflag, size = 0x4, scoped, tag = 'scoped memory for tpu_custom_call.1']
    #allocation7 [shape = 'u8[65536]{0}', space=vmem, size = 0x10000, scoped, tag = 'output window, operand 0, single buffered']
    #allocation8 [shape = 'u8[65536]{0}', space=vmem, size = 0x10000, scoped, tag = 'output window, operand 1, single buffered']
    #allocation9 [shape = 's32[1]{0}', space=sflag, size = 0x4, scoped, tag = 'scoped memory for tpu_custom_call.1']
    %9 = vsyncpa [#allocation3], 0
    %10 = vsyncpa [#allocation6], 0
    %11 = vsyncpa [#allocation4], 0
    %12 = vsyncpa [#allocation9], 0
    // Predicated region
    $region2: #{tpu_custom_call.1} parent=1 // pred_check
      _
    $region3: #{tpu_custom_call.1} parent=1 // pred_check_branch
      %14 = sbr.rel (0) target = $region5
    $region4: #{tpu_custom_call.1} parent=1 // pred_region
      %16 = vsyncadd [#allocation3], 0
      %s17 = sshll.u32 %s0, 4
      %s18 = int_to_ptr.hbm [resolvable:$true] %s17
      %s19 = sshll.u32 [#allocation2], 4
      %s20 = int_to_ptr.vmem [resolvable:$true] %s19
      %25 = dma.hbm_to_vmem [thread:$0]  %s18, 2048, %s20, [#allocation3], 128, 128, 8
    $region5: #{tpu_custom_call.1} parent=1 // pred_fallthru
      _
    // Predicated region
    $region6: #{tpu_custom_call.1} parent=1 // pred_check
      _
    $region7: #{tpu_custom_call.1} parent=1 // pred_check_branch
      %27 = sbr.rel (0) target = $region9
    $region8: #{tpu_custom_call.1} parent=1 // pred_region
      %29 = vsyncadd [#allocation6], 0
      %s30 = sshll.u32 %s1, 4
      %s31 = int_to_ptr.hbm [resolvable:$true] %s30
      %s32 = sshll.u32 [#allocation5], 4
      %s33 = int_to_ptr.vmem [resolvable:$true] %s32
      %38 = dma.hbm_to_vmem [thread:$0]  %s31, 2048, %s33, [#allocation6], 128, 128, 8
    $region9: #{tpu_custom_call.1} parent=1 // pred_fallthru
      _
    // Predicated region
    $region10: #{tpu_custom_call.1} parent=1 // pred_check
      _
    $region11: #{tpu_custom_call.1} parent=1 // pred_check_branch
      %40 = sbr.rel (0) target = $region13
    $region12: #{tpu_custom_call.1} parent=1 // pred_region
      %42 = dma.done [#allocation3], 2048
    $region13: #{tpu_custom_call.1} parent=1 // pred_fallthru
      _
    // Predicated region
    $region14: #{tpu_custom_call.1} parent=1 // pred_check
      _
    $region15: #{tpu_custom_call.1} parent=1 // pred_check_branch
      %44 = sbr.rel (0) target = $region17
    $region16: #{tpu_custom_call.1} parent=1 // pred_region
      %46 = dma.done [#allocation6], 2048
    $region17: #{tpu_custom_call.1} parent=1 // pred_fallthru
      _
    %v47 = vld [vmem:[#allocation2] sm:$0xff]
    %v48 = vld [vmem:[#allocation2 + $0x8] sm:$0xff]
    %v49 = vld [vmem:[#allocation2 + $0x10] sm:$0xff]
    %v50 = vld [vmem:[#allocation2 + $0x18] sm:$0xff]
    %v51 = vld [vmem:[#allocation2 + $0x20] sm:$0xff]
    %v52 = vld [vmem:[#allocation2 + $0x28] sm:$0xff]
    %v53 = vld [vmem:[#allocation2 + $0x30] sm:$0xff]
    %v54 = vld [vmem:[#allocation2 + $0x38] sm:$0xff]
    %v55 = vld [vmem:[#allocation2 + $0x40] sm:$0xff]
    %v56 = vld [vmem:[#allocation2 + $0x48] sm:$0xff]
    %v57 = vld [vmem:[#allocation2 + $0x50] sm:$0xff]
    %v58 = vld [vmem:[#allocation2 + $0x58] sm:$0xff]
    %v59 = vld [vmem:[#allocation2 + $0x60] sm:$0xff]
    %v60 = vld [vmem:[#allocation2 + $0x68] sm:$0xff]
    %v61 = vld [vmem:[#allocation2 + $0x70] sm:$0xff]
    %v62 = vld [vmem:[#allocation2 + $0x78] sm:$0xff]
    %v63 = vld [vmem:[#allocation5] sm:$0xff]
    %v64 = vld [vmem:[#allocation5 + $0x8] sm:$0xff]
    %v65 = vld [vmem:[#allocation5 + $0x10] sm:$0xff]
    %v66 = vld [vmem:[#allocation5 + $0x18] sm:$0xff]
    %v67 = vld [vmem:[#allocation5 + $0x20] sm:$0xff]
    %v68 = vld [vmem:[#allocation5 + $0x28] sm:$0xff]
    %v69 = vld [vmem:[#allocation5 + $0x30] sm:$0xff]
    %v70 = vld [vmem:[#allocation5 + $0x38] sm:$0xff]
    %v71 = vld [vmem:[#allocation5 + $0x40] sm:$0xff]
    %v72 = vld [vmem:[#allocation5 + $0x48] sm:$0xff]
    %v73 = vld [vmem:[#allocation5 + $0x50] sm:$0xff]
    %v74 = vld [vmem:[#allocation5 + $0x58] sm:$0xff]
    %v75 = vld [vmem:[#allocation5 + $0x60] sm:$0xff]
    %v76 = vld [vmem:[#allocation5 + $0x68] sm:$0xff]
    %v77 = vld [vmem:[#allocation5 + $0x70] sm:$0xff]
    %v78 = vld [vmem:[#allocation5 + $0x78] sm:$0xff]
    %v79 = vadd.f32 %v47, %v63
    %v80 = vadd.f32 %v48, %v64
    %v81 = vadd.f32 %v49, %v65
    %v82 = vadd.f32 %v50, %v66
    %v83 = vadd.f32 %v51, %v67
    %v84 = vadd.f32 %v52, %v68
    %v85 = vadd.f32 %v53, %v69
    %v86 = vadd.f32 %v54, %v70
    %v87 = vadd.f32 %v55, %v71
    %v88 = vadd.f32 %v56, %v72
    %v89 = vadd.f32 %v57, %v73
    %v90 = vadd.f32 %v58, %v74
    %v91 = vadd.f32 %v59, %v75
    %v92 = vadd.f32 %v60, %v76
    %v93 = vadd.f32 %v61, %v77
    %v94 = vadd.f32 %v62, %v78
    %v95 = vmul.f32 %v79, 0.1
    %v96 = vmul.f32 %v80, 0.1
    %v97 = vmul.f32 %v81, 0.1
    %v98 = vmul.f32 %v82, 0.1
    %v99 = vmul.f32 %v83, 0.1
    %v100 = vmul.f32 %v84, 0.1
    %v101 = vmul.f32 %v85, 0.1
    %v102 = vmul.f32 %v86, 0.1
    %v103 = vmul.f32 %v87, 0.1
    %v104 = vmul.f32 %v88, 0.1
    %v105 = vmul.f32 %v89, 0.1
    %v106 = vmul.f32 %v90, 0.1
    %v107 = vmul.f32 %v91, 0.1
    %v108 = vmul.f32 %v92, 0.1
    %v109 = vmul.f32 %v93, 0.1
    %v110 = vmul.f32 %v94, 0.1
    %111 = vmax.xlane.f32.xlu0 %v95
    %v112 = vpop.xlane.xlu0 %111
    %113 = vmax.xlane.f32.xlu0 %v96
    %v114 = vpop.xlane.xlu0 %113
    %115 = vmax.xlane.f32.xlu0 %v97
    %v116 = vpop.xlane.xlu0 %115
    %117 = vmax.xlane.f32.xlu0 %v98
    %v118 = vpop.xlane.xlu0 %117
    %119 = vmax.xlane.f32.xlu0 %v99
    %v120 = vpop.xlane.xlu0 %119
    %121 = vmax.xlane.f32.xlu0 %v100
    %v122 = vpop.xlane.xlu0 %121
    %123 = vmax.xlane.f32.xlu0 %v101
    %v124 = vpop.xlane.xlu0 %123
    %125 = vmax.xlane.f32.xlu0 %v102
    %v126 = vpop.xlane.xlu0 %125
    %127 = vmax.xlane.f32.xlu0 %v103
    %v128 = vpop.xlane.xlu0 %127
    %129 = vmax.xlane.f32.xlu0 %v104
    %v130 = vpop.xlane.xlu0 %129
    %131 = vmax.xlane.f32.xlu0 %v105
    %v132 = vpop.xlane.xlu0 %131
    %133 = vmax.xlane.f32.xlu0 %v106
    %v134 = vpop.xlane.xlu0 %133
    %135 = vmax.xlane.f32.xlu0 %v107
    %v136 = vpop.xlane.xlu0 %135
    %137 = vmax.xlane.f32.xlu0 %v108
    %v138 = vpop.xlane.xlu0 %137
    %139 = vmax.xlane.f32.xlu0 %v109
    %v140 = vpop.xlane.xlu0 %139
    %141 = vmax.xlane.f32.xlu0 %v110
    %v142 = vpop.xlane.xlu0 %141
    %v143 = vsub.f32 %v95, %v112
    %v144 = vsub.f32 %v96, %v114
    %v145 = vsub.f32 %v97, %v116
    %v146 = vsub.f32 %v98, %v118
    %v147 = vsub.f32 %v99, %v120
    %v148 = vsub.f32 %v100, %v122
    %v149 = vsub.f32 %v101, %v124
    %v150 = vsub.f32 %v102, %v126
    %v151 = vsub.f32 %v103, %v128
    %v152 = vsub.f32 %v104, %v130
    %v153 = vsub.f32 %v105, %v132
    %v154 = vsub.f32 %v106, %v134
    %v155 = vsub.f32 %v107, %v136
    %v156 = vsub.f32 %v108, %v138
    %v157 = vsub.f32 %v109, %v140
    %v158 = vsub.f32 %v110, %v142
    %v159 = vmul.f32 %v143, 1.442695
    %v160 = vpow.pop %v159
    %v161 = vmul.f32 %v144, 1.442695
    %v162 = vpow.pop %v161
    %v163 = vmul.f32 %v145, 1.442695
    %v164 = vpow.pop %v163
    %v165 = vmul.f32 %v146, 1.442695
    %v166 = vpow.pop %v165
    %v167 = vmul.f32 %v147, 1.442695
    %v168 = vpow.pop %v167
    %v169 = vmul.f32 %v148, 1.442695
    %v170 = vpow.pop %v169
    %v171 = vmul.f32 %v149, 1.442695
    %v172 = vpow.pop %v171
    %v173 = vmul.f32 %v150, 1.442695
    %v174 = vpow.pop %v173
    %v175 = vmul.f32 %v151, 1.442695
    %v176 = vpow.pop %v175
    %v177 = vmul.f32 %v152, 1.442695
    %v178 = vpow.pop %v177
    %v179 = vmul.f32 %v153, 1.442695
    %v180 = vpow.pop %v179
    %v181 = vmul.f32 %v154, 1.442695
    %v182 = vpow.pop %v181
    %v183 = vmul.f32 %v155, 1.442695
    %v184 = vpow.pop %v183
    %v185 = vmul.f32 %v156, 1.442695
    %v186 = vpow.pop %v185
    %v187 = vmul.f32 %v157, 1.442695
    %v188 = vpow.pop %v187
    %v189 = vmul.f32 %v158, 1.442695
    %v190 = vpow.pop %v189
    %191 = vadd.xlane.f32.xlu0 %v160
    %v192 = vpop.xlane.xlu0 %191
    %193 = vadd.xlane.f32.xlu0 %v162
    %v194 = vpop.xlane.xlu0 %193
    %195 = vadd.xlane.f32.xlu0 %v164
    %v196 = vpop.xlane.xlu0 %195
    %197 = vadd.xlane.f32.xlu0 %v166
    %v198 = vpop.xlane.xlu0 %197
    %199 = vadd.xlane.f32.xlu0 %v168
    %v200 = vpop.xlane.xlu0 %199
    %201 = vadd.xlane.f32.xlu0 %v170
    %v202 = vpop.xlane.xlu0 %201
    %203 = vadd.xlane.f32.xlu0 %v172
    %v204 = vpop.xlane.xlu0 %203
    %205 = vadd.xlane.f32.xlu0 %v174
    %v206 = vpop.xlane.xlu0 %205
    %207 = vadd.xlane.f32.xlu0 %v176
    %v208 = vpop.xlane.xlu0 %207
    %209 = vadd.xlane.f32.xlu0 %v178
    %v210 = vpop.xlane.xlu0 %209
    %211 = vadd.xlane.f32.xlu0 %v180
    %v212 = vpop.xlane.xlu0 %211
    %213 = vadd.xlane.f32.xlu0 %v182
    %v214 = vpop.xlane.xlu0 %213
    %215 = vadd.xlane.f32.xlu0 %v184
    %v216 = vpop.xlane.xlu0 %215
    %217 = vadd.xlane.f32.xlu0 %v186
    %v218 = vpop.xlane.xlu0 %217
    %219 = vadd.xlane.f32.xlu0 %v188
    %v220 = vpop.xlane.xlu0 %219
    %221 = vadd.xlane.f32.xlu0 %v190
    %v222 = vpop.xlane.xlu0 %221
    %v223 = vrcp.pop %v192
    %v224 = vmul.f32 %v192, %v223
    %v225 = vsub.f32 1.0, %v224
    %v226 = vmul.f32 %v223, %v225
    %v227 = vadd.f32 %v223, %v226
    %vm228 = vweird.f32 %v192
    %vm229 = vweird.f32 %v223
    %vm230 = vmor %vm228, %vm229
    %v231 = vsel %vm230, %v223, %v227
    %v232 = vand.u32 2147483647, %v192
    %vm233 = vcmp.eq.f32.partialorder %v232, 8.507059e+37
    %v234 = vand.u32 %v192, 2147483648
    %v235 = vor.u32 1.1754944e-38, %v234
    %v236 = vsel %vm233, %v235, %v231
    %v237 = vmul.f32 %v160, %v236
    %v238 = vrcp.pop %v194
    %v239 = vmul.f32 %v194, %v238
    %v240 = vsub.f32 1.0, %v239
    %v241 = vmul.f32 %v238, %v240
    %v242 = vadd.f32 %v238, %v241
    %vm243 = vweird.f32 %v194
    %vm244 = vweird.f32 %v238
    %vm245 = vmor %vm243, %vm244
    %v246 = vsel %vm245, %v238, %v242
    %v247 = vand.u32 2147483647, %v194
    %vm248 = vcmp.eq.f32.partialorder %v247, 8.507059e+37
    %v249 = vand.u32 %v194, 2147483648
    %v250 = vor.u32 1.1754944e-38, %v249
    %v251 = vsel %vm248, %v250, %v246
    %v252 = vmul.f32 %v162, %v251
    %v253 = vrcp.pop %v196
    %v254 = vmul.f32 %v196, %v253
    %v255 = vsub.f32 1.0, %v254
    %v256 = vmul.f32 %v253, %v255
    %v257 = vadd.f32 %v253, %v256
    %vm258 = vweird.f32 %v196
    %vm259 = vweird.f32 %v253
    %vm260 = vmor %vm258, %vm259
    %v261 = vsel %vm260, %v253, %v257
    %v262 = vand.u32 2147483647, %v196
    %vm263 = vcmp.eq.f32.partialorder %v262, 8.507059e+37
    %v264 = vand.u32 %v196, 2147483648
    %v265 = vor.u32 1.1754944e-38, %v264
    %v266 = vsel %vm263, %v265, %v261
    %v267 = vmul.f32 %v164, %v266
    %v268 = vrcp.pop %v198
    %v269 = vmul.f32 %v198, %v268
    %v270 = vsub.f32 1.0, %v269
    %v271 = vmul.f32 %v268, %v270
    %v272 = vadd.f32 %v268, %v271
    %vm273 = vweird.f32 %v198
    %vm274 = vweird.f32 %v268
    %vm275 = vmor %vm273, %vm274
    %v276 = vsel %vm275, %v268, %v272
    %v277 = vand.u32 2147483647, %v198
    %vm278 = vcmp.eq.f32.partialorder %v277, 8.507059e+37
    %v279 = vand.u32 %v198, 2147483648
    %v280 = vor.u32 1.1754944e-38, %v279
    %v281 = vsel %vm278, %v280, %v276
    %v282 = vmul.f32 %v166, %v281
    %v283 = vrcp.pop %v200
    %v284 = vmul.f32 %v200, %v283
    %v285 = vsub.f32 1.0, %v284
    %v286 = vmul.f32 %v283, %v285
    %v287 = vadd.f32 %v283, %v286
    %vm288 = vweird.f32 %v200
    %vm289 = vweird.f32 %v283
    %vm290 = vmor %vm288, %vm289
    %v291 = vsel %vm290, %v283, %v287
    %v292 = vand.u32 2147483647, %v200
    %vm293 = vcmp.eq.f32.partialorder %v292, 8.507059e+37
    %v294 = vand.u32 %v200, 2147483648
    %v295 = vor.u32 1.1754944e-38, %v294
    %v296 = vsel %vm293, %v295, %v291
    %v297 = vmul.f32 %v168, %v296
    %v298 = vrcp.pop %v202
    %v299 = vmul.f32 %v202, %v298
    %v300 = vsub.f32 1.0, %v299
    %v301 = vmul.f32 %v298, %v300
    %v302 = vadd.f32 %v298, %v301
    %vm303 = vweird.f32 %v202
    %vm304 = vweird.f32 %v298
    %vm305 = vmor %vm303, %vm304
    %v306 = vsel %vm305, %v298, %v302
    %v307 = vand.u32 2147483647, %v202
    %vm308 = vcmp.eq.f32.partialorder %v307, 8.507059e+37
    %v309 = vand.u32 %v202, 2147483648
    %v310 = vor.u32 1.1754944e-38, %v309
    %v311 = vsel %vm308, %v310, %v306
    %v312 = vmul.f32 %v170, %v311
    %v313 = vrcp.pop %v204
    %v314 = vmul.f32 %v204, %v313
    %v315 = vsub.f32 1.0, %v314
    %v316 = vmul.f32 %v313, %v315
    %v317 = vadd.f32 %v313, %v316
    %vm318 = vweird.f32 %v204
    %vm319 = vweird.f32 %v313
    %vm320 = vmor %vm318, %vm319
    %v321 = vsel %vm320, %v313, %v317
    %v322 = vand.u32 2147483647, %v204
    %vm323 = vcmp.eq.f32.partialorder %v322, 8.507059e+37
    %v324 = vand.u32 %v204, 2147483648
    %v325 = vor.u32 1.1754944e-38, %v324
    %v326 = vsel %vm323, %v325, %v321
    %v327 = vmul.f32 %v172, %v326
    %v328 = vrcp.pop %v206
    %v329 = vmul.f32 %v206, %v328
    %v330 = vsub.f32 1.0, %v329
    %v331 = vmul.f32 %v328, %v330
    %v332 = vadd.f32 %v328, %v331
    %vm333 = vweird.f32 %v206
    %vm334 = vweird.f32 %v328
    %vm335 = vmor %vm333, %vm334
    %v336 = vsel %vm335, %v328, %v332
    %v337 = vand.u32 2147483647, %v206
    %vm338 = vcmp.eq.f32.partialorder %v337, 8.507059e+37
    %v339 = vand.u32 %v206, 2147483648
    %v340 = vor.u32 1.1754944e-38, %v339
    %v341 = vsel %vm338, %v340, %v336
    %v342 = vmul.f32 %v174, %v341
    %v343 = vrcp.pop %v208
    %v344 = vmul.f32 %v208, %v343
    %v345 = vsub.f32 1.0, %v344
    %v346 = vmul.f32 %v343, %v345
    %v347 = vadd.f32 %v343, %v346
    %vm348 = vweird.f32 %v208
    %vm349 = vweird.f32 %v343
    %vm350 = vmor %vm348, %vm349
    %v351 = vsel %vm350, %v343, %v347
    %v352 = vand.u32 2147483647, %v208
    %vm353 = vcmp.eq.f32.partialorder %v352, 8.507059e+37
    %v354 = vand.u32 %v208, 2147483648
    %v355 = vor.u32 1.1754944e-38, %v354
    %v356 = vsel %vm353, %v355, %v351
    %v357 = vmul.f32 %v176, %v356
    %v358 = vrcp.pop %v210
    %v359 = vmul.f32 %v210, %v358
    %v360 = vsub.f32 1.0, %v359
    %v361 = vmul.f32 %v358, %v360
    %v362 = vadd.f32 %v358, %v361
    %vm363 = vweird.f32 %v210
    %vm364 = vweird.f32 %v358
    %vm365 = vmor %vm363, %vm364
    %v366 = vsel %vm365, %v358, %v362
    %v367 = vand.u32 2147483647, %v210
    %vm368 = vcmp.eq.f32.partialorder %v367, 8.507059e+37
    %v369 = vand.u32 %v210, 2147483648
    %v370 = vor.u32 1.1754944e-38, %v369
    %v371 = vsel %vm368, %v370, %v366
    %v372 = vmul.f32 %v178, %v371
    %v373 = vrcp.pop %v212
    %v374 = vmul.f32 %v212, %v373
    %v375 = vsub.f32 1.0, %v374
    %v376 = vmul.f32 %v373, %v375
    %v377 = vadd.f32 %v373, %v376
    %vm378 = vweird.f32 %v212
    %vm379 = vweird.f32 %v373
    %vm380 = vmor %vm378, %vm379
    %v381 = vsel %vm380, %v373, %v377
    %v382 = vand.u32 2147483647, %v212
    %vm383 = vcmp.eq.f32.partialorder %v382, 8.507059e+37
    %v384 = vand.u32 %v212, 2147483648
    %v385 = vor.u32 1.1754944e-38, %v384
    %v386 = vsel %vm383, %v385, %v381
    %v387 = vmul.f32 %v180, %v386
    %v388 = vrcp.pop %v214
    %v389 = vmul.f32 %v214, %v388
    %v390 = vsub.f32 1.0, %v389
    %v391 = vmul.f32 %v388, %v390
    %v392 = vadd.f32 %v388, %v391
    %vm393 = vweird.f32 %v214
    %vm394 = vweird.f32 %v388
    %vm395 = vmor %vm393, %vm394
    %v396 = vsel %vm395, %v388, %v392
    %v397 = vand.u32 2147483647, %v214
    %vm398 = vcmp.eq.f32.partialorder %v397, 8.507059e+37
    %v399 = vand.u32 %v214, 2147483648
    %v400 = vor.u32 1.1754944e-38, %v399
    %v401 = vsel %vm398, %v400, %v396
    %v402 = vmul.f32 %v182, %v401
    %v403 = vrcp.pop %v216
    %v404 = vmul.f32 %v216, %v403
    %v405 = vsub.f32 1.0, %v404
    %v406 = vmul.f32 %v403, %v405
    %v407 = vadd.f32 %v403, %v406
    %vm408 = vweird.f32 %v216
    %vm409 = vweird.f32 %v403
    %vm410 = vmor %vm408, %vm409
    %v411 = vsel %vm410, %v403, %v407
    %v412 = vand.u32 2147483647, %v216
    %vm413 = vcmp.eq.f32.partialorder %v412, 8.507059e+37
    %v414 = vand.u32 %v216, 2147483648
    %v415 = vor.u32 1.1754944e-38, %v414
    %v416 = vsel %vm413, %v415, %v411
    %v417 = vmul.f32 %v184, %v416
    %v418 = vrcp.pop %v218
    %v419 = vmul.f32 %v218, %v418
    %v420 = vsub.f32 1.0, %v419
    %v421 = vmul.f32 %v418, %v420
    %v422 = vadd.f32 %v418, %v421
    %vm423 = vweird.f32 %v218
    %vm424 = vweird.f32 %v418
    %vm425 = vmor %vm423, %vm424
    %v426 = vsel %vm425, %v418, %v422
    %v427 = vand.u32 2147483647, %v218
    %vm428 = vcmp.eq.f32.partialorder %v427, 8.507059e+37
    %v429 = vand.u32 %v218, 2147483648
    %v430 = vor.u32 1.1754944e-38, %v429
    %v431 = vsel %vm428, %v430, %v426
    %v432 = vmul.f32 %v186, %v431
    %v433 = vrcp.pop %v220
    %v434 = vmul.f32 %v220, %v433
    %v435 = vsub.f32 1.0, %v434
    %v436 = vmul.f32 %v433, %v435
    %v437 = vadd.f32 %v433, %v436
    %vm438 = vweird.f32 %v220
    %vm439 = vweird.f32 %v433
    %vm440 = vmor %vm438, %vm439
    %v441 = vsel %vm440, %v433, %v437
    %v442 = vand.u32 2147483647, %v220
    %vm443 = vcmp.eq.f32.partialorder %v442, 8.507059e+37
    %v444 = vand.u32 %v220, 2147483648
    %v445 = vor.u32 1.1754944e-38, %v444
    %v446 = vsel %vm443, %v445, %v441
    %v447 = vmul.f32 %v188, %v446
    %v448 = vrcp.pop %v222
    %v449 = vmul.f32 %v222, %v448
    %v450 = vsub.f32 1.0, %v449
    %v451 = vmul.f32 %v448, %v450
    %v452 = vadd.f32 %v448, %v451
    %vm453 = vweird.f32 %v222
    %vm454 = vweird.f32 %v448
    %vm455 = vmor %vm453, %vm454
    %v456 = vsel %vm455, %v448, %v452
    %v457 = vand.u32 2147483647, %v222
    %vm458 = vcmp.eq.f32.partialorder %v457, 8.507059e+37
    %v459 = vand.u32 %v222, 2147483648
    %v460 = vor.u32 1.1754944e-38, %v459
    %v461 = vsel %vm458, %v460, %v456
    %v462 = vmul.f32 %v190, %v461
    %463 = vst [vmem:[#allocation7] sm:$0xff] %v237
    %464 = vst [vmem:[#allocation7 + $0x8] sm:$0xff] %v252
    %465 = vst [vmem:[#allocation7 + $0x10] sm:$0xff] %v267
    %466 = vst [vmem:[#allocation7 + $0x18] sm:$0xff] %v282
    %467 = vst [vmem:[#allocation7 + $0x20] sm:$0xff] %v297
    %468 = vst [vmem:[#allocation7 + $0x28] sm:$0xff] %v312
    %469 = vst [vmem:[#allocation7 + $0x30] sm:$0xff] %v327
    %470 = vst [vmem:[#allocation7 + $0x38] sm:$0xff] %v342
    %471 = vst [vmem:[#allocation7 + $0x40] sm:$0xff] %v357
    %472 = vst [vmem:[#allocation7 + $0x48] sm:$0xff] %v372
    %473 = vst [vmem:[#allocation7 + $0x50] sm:$0xff] %v387
    %474 = vst [vmem:[#allocation7 + $0x58] sm:$0xff] %v402
    %475 = vst [vmem:[#allocation7 + $0x60] sm:$0xff] %v417
    %476 = vst [vmem:[#allocation7 + $0x68] sm:$0xff] %v432
    %477 = vst [vmem:[#allocation7 + $0x70] sm:$0xff] %v447
    %478 = vst [vmem:[#allocation7 + $0x78] sm:$0xff] %v462
    %479 = vxpose.xlu0.b32.start [1/16] %v237, 128
    %480 = vxpose.xlu0.b32.cont [2/16] %v252, 128
    %481 = vxpose.xlu0.b32.cont [3/16] %v267, 128
    %482 = vxpose.xlu0.b32.cont [4/16] %v282, 128
    %483 = vxpose.xlu0.b32.cont [5/16] %v297, 128
    %484 = vxpose.xlu0.b32.cont [6/16] %v312, 128
    %485 = vxpose.xlu0.b32.cont [7/16] %v327, 128
    %486 = vxpose.xlu0.b32.cont [8/16] %v342, 128
    %487 = vxpose.xlu0.b32.cont [9/16] %v357, 128
    %488 = vxpose.xlu0.b32.cont [10/16] %v372, 128
    %489 = vxpose.xlu0.b32.cont [11/16] %v387, 128
    %490 = vxpose.xlu0.b32.cont [12/16] %v402, 128
    %491 = vxpose.xlu0.b32.cont [13/16] %v417, 128
    %492 = vxpose.xlu0.b32.cont [14/16] %v432, 128
    %493 = vxpose.xlu0.b32.cont [15/16] %v447, 128
    %494 = vxpose.xlu0.b32.end [16/16] %v462, 128
    %v495 = vpop.trf.xlu0
    %v496 = vpop.trf.xlu0
    %v497 = vpop.trf.xlu0
    %v498 = vpop.trf.xlu0
    %v499 = vpop.trf.xlu0
    %v500 = vpop.trf.xlu0
    %v501 = vpop.trf.xlu0
    %v502 = vpop.trf.xlu0
    %v503 = vpop.trf.xlu0
    %v504 = vpop.trf.xlu0
    %v505 = vpop.trf.xlu0
    %v506 = vpop.trf.xlu0
    %v507 = vpop.trf.xlu0
    %v508 = vpop.trf.xlu0
    %v509 = vpop.trf.xlu0
    %v510 = vpop.trf.xlu0
    %511 = vst [vmem:[#allocation8] sm:$0xff] %v495
    %512 = vst [vmem:[#allocation8 + $0x8] sm:$0xff] %v496
    %513 = vst [vmem:[#allocation8 + $0x10] sm:$0xff] %v497
    %514 = vst [vmem:[#allocation8 + $0x18] sm:$0xff] %v498
    %515 = vst [vmem:[#allocation8 + $0x20] sm:$0xff] %v499
    %516 = vst [vmem:[#allocation8 + $0x28] sm:$0xff] %v500
    %517 = vst [vmem:[#allocation8 + $0x30] sm:$0xff] %v501
    %518 = vst [vmem:[#allocation8 + $0x38] sm:$0xff] %v502
    %519 = vst [vmem:[#allocation8 + $0x40] sm:$0xff] %v503
    %520 = vst [vmem:[#allocation8 + $0x48] sm:$0xff] %v504
    %521 = vst [vmem:[#allocation8 + $0x50] sm:$0xff] %v505
    %522 = vst [vmem:[#allocation8 + $0x58] sm:$0xff] %v506
    %523 = vst [vmem:[#allocation8 + $0x60] sm:$0xff] %v507
    %524 = vst [vmem:[#allocation8 + $0x68] sm:$0xff] %v508
    %525 = vst [vmem:[#allocation8 + $0x70] sm:$0xff] %v509
    %526 = vst [vmem:[#allocation8 + $0x78] sm:$0xff] %v510
    // Predicated region
    $region18: #{tpu_custom_call.1} parent=1 // pred_check
      _
    $region19: #{tpu_custom_call.1} parent=1 // pred_check_branch
      %528 = sbr.rel (0) target = $region21
    $region20: #{tpu_custom_call.1} parent=1 // pred_region
      %530 = vsyncadd [#allocation4], 0
      %s531 = sshll.u32 [#allocation7], 4
      %s532 = int_to_ptr.vmem [resolvable:$true] %s531
      %s533 = sshll.u32 %s2, 4
      %s534 = int_to_ptr.hbm [resolvable:$true] %s533
      %539 = dma.vmem_to_hbm [thread:$0]  %s532, 2048, %s534, [#allocation4], 128, 128, 8
    $region21: #{tpu_custom_call.1} parent=1 // pred_fallthru
      _
    // Predicated region
    $region22: #{tpu_custom_call.1} parent=1 // pred_check
      _
    $region23: #{tpu_custom_call.1} parent=1 // pred_check_branch
      %541 = sbr.rel (0) target = $region25
    $region24: #{tpu_custom_call.1} parent=1 // pred_region
      %543 = vsyncadd [#allocation9], 0
      %s544 = sshll.u32 [#allocation8], 4
      %s545 = int_to_ptr.vmem [resolvable:$true] %s544
      %s546 = sshll.u32 %s3, 4
      %s547 = int_to_ptr.hbm [resolvable:$true] %s546
      %552 = dma.vmem_to_hbm [thread:$0]  %s545, 2048, %s547, [#allocation9], 128, 128, 8
    $region25: #{tpu_custom_call.1} parent=1 // pred_fallthru
      _
    // Predicated region
    $region26: #{tpu_custom_call.1} parent=1 // pred_check
      _
    $region27: #{tpu_custom_call.1} parent=1 // pred_check_branch
      %554 = sbr.rel (0) target = $region29
    $region28: #{tpu_custom_call.1} parent=1 // pred_region
      %556 = dma.done [#allocation4], 2048
    $region29: #{tpu_custom_call.1} parent=1 // pred_fallthru
      _
    // Predicated region
    $region30: #{tpu_custom_call.1} parent=1 // pred_check
      _
    $region31: #{tpu_custom_call.1} parent=1 // pred_check_branch
      %558 = sbr.rel (0) target = $region33
    $region32: #{tpu_custom_call.1} parent=1 // pred_region
      %560 = dma.done [#allocation9], 2048
    $region33: #{tpu_custom_call.1} parent=1 // pred_fallthru
      _
    %561 = vsyncpa [#allocation3], 1
    %562 = vsyncpa [#allocation6], 1
    %563 = vsyncpa [#allocation4], 1
    %564 = vsyncpa [#allocation9], 1

</llo_original>
